<compile_context>
chip_gen: v6e
topology: v6e:2x2x1
jax: 0.10.0
libtpu: 0.0.40
codegen_flags: <defaults>
</compile_context>

<pallas_src>
import functools

import jax
import jax.numpy as jnp
from jax.experimental import pallas as pl
from jax.experimental.pallas import tpu as pltpu

LANE = 128
SUBLANE = 8


def _round_up(n, m):
    return ((n + m - 1) // m) * m


# ---------------------------------------------------------------------------
# Pallas kernel: whole network for one batch tile.
#   refs = (x_ref, w0_ref, b0_ref, w1_ref, b1_ref, ..., o_ref)
# ---------------------------------------------------------------------------
def _fcn_fused_kernel(*refs, acts, negative_slope):
    x_ref = refs[0]
    o_ref = refs[-1]
    params = refs[1:-1]                      # (w0, b0, w1, b1, ...)
    h = x_ref[...]                           # (tb, Fin_pad) f32
    for layer, act in enumerate(acts):       # static unroll over layers
        w = params[2 * layer][...]           # (Fin_pad, Fout_pad)
        b = params[2 * layer + 1][...]       # (1, Fout_pad)
        h = jnp.dot(h, w, preferred_element_type=jnp.float32) + b   # MXU
        if act:
            h = jnp.where(h >= 0, h, negative_slope * h)             # LeakyReLU
    o_ref[...] = h.astype(o_ref.dtype)       # lane-dense store (Fout_pad % 128 == 0)


# ---------------------------------------------------------------------------
# Wrapper: pads, builds BlockSpecs, single pallas_call, slices padding off.
# ---------------------------------------------------------------------------
def fcn_baseline_forward(layers, x, *, leaky_relu=0.15, tb=None):
    """layers: list of (w (Fin,Fout), b (Fout,), apply_act); x: (B, Fin) f32."""
    B, Fin = x.shape
    Fout = layers[-1][0].shape[1]
    assert layers[0][0].shape[0] == Fin

    # --- pad every feature dim up to a multiple of 128 (lane-dense) ---------
    padded_w, padded_b, acts = [], [], []
    for w, b, act in layers:
        fi, fo = w.shape
        fi_p, fo_p = _round_up(fi, LANE), _round_up(fo, LANE)
        wp = jnp.zeros((fi_p, fo_p), jnp.float32).at[:fi, :fo].set(w)
        bp = jnp.zeros((1, fo_p), jnp.float32).at[0, :fo].set(b)
        padded_w.append(wp)
        padded_b.append(bp)
        acts.append(bool(act))
    Fin_p = padded_w[0].shape[0]
    Fout_p = padded_w[-1].shape[1]

    # --- pad batch to a multiple of the batch tile --------------------------
    if tb is None:
        tb = min(128, _round_up(B, SUBLANE))
    tb = _round_up(tb, SUBLANE)
    B_p = _round_up(B, tb)
    x_p = jnp.zeros((B_p, Fin_p), jnp.float32).at[:B, :Fin].set(x)

    grid = (B_p // tb,)

    # BlockSpecs: x/out tile over batch; weights/biases are grid-invariant
    # (constant index_map -> fetched once, VMEM-resident across grid steps).
    in_specs = [pl.BlockSpec((tb, Fin_p), lambda i: (i, 0))]
    flat_params = []
    for wp, bp in zip(padded_w, padded_b):
        in_specs.append(pl.BlockSpec(wp.shape, lambda i: (0, 0)))
        in_specs.append(pl.BlockSpec(bp.shape, lambda i: (0, 0)))
        flat_params.extend([wp, bp])
    out_specs = pl.BlockSpec((tb, Fout_p), lambda i: (i, 0))

    kernel = functools.partial(_fcn_fused_kernel,
                               acts=tuple(acts),
                               negative_slope=leaky_relu)

    out_p = pl.pallas_call(
        kernel,
        out_shape=jax.ShapeDtypeStruct((B_p, Fout_p), jnp.float32),
        grid_spec=pltpu.PrefetchScalarGridSpec(
            num_scalar_prefetch=0,
            grid=grid,
            in_specs=in_specs,
            out_specs=out_specs,
        ),
        compiler_params=pltpu.CompilerParams(
            dimension_semantics=("parallel",)),
    )(x_p, *flat_params)

    return out_p[:B, :Fout]


# ---------------------------------------------------------------------------
# Parameter construction (deterministic, mimics PyTorch default inits)
# ---------------------------------------------------------------------------
def _linear_params(key, fan_in, fan_out):
    kw, kb = jax.random.split(key)
    bound = 1.0 / jnp.sqrt(jnp.float32(fan_in))
    # PyTorch Linear stores weight as (out, in); we keep (in, out) for x @ W.
    w = jax.random.uniform(kw, (fan_in, fan_out), jnp.float32, -bound, bound)
    b = jax.random.uniform(kb, (fan_out,), jnp.float32, -bound, bound)
    return w, b


def _bn_params(key, num_features, eps=1e-5):
    kg, kb, km, kv = jax.random.split(key, 4)
    gamma = 1.0 + 0.1 * jax.random.normal(kg, (num_features,), jnp.float32)
    beta = 0.1 * jax.random.normal(kb, (num_features,), jnp.float32)
    running_mean = 0.1 * jax.random.normal(km, (num_features,), jnp.float32)
    running_var = 1.0 + 0.1 * jax.random.uniform(kv, (num_features,),
                                                 jnp.float32)
    return gamma, beta, running_mean, running_var, eps


def _fold_bn_into_linear(w, b, gamma, beta, mean, var, eps):
    # y = gamma * ((x@W + b) - mean) / sqrt(var + eps) + beta
    #   = x @ (W * scale) + ((b - mean) * scale + beta)
    scale = gamma / jnp.sqrt(var + eps)
    return w * scale[None, :], (b - mean) * scale + beta


def init_fcn_baseline(key, input_size, num_layers, hidden_size, output_size):
    """Returns a list of (w, b, apply_act) per fused layer."""
    keys = jax.random.split(key, num_layers)
    if num_layers == 1:
        w, b = _linear_params(keys[0], input_size, output_size)
        return [(w, b, False)]
    layers = []
    # input layer + intermediate layers: Linear+BN+Dropout+LeakyReLU, fused.
    dims_in = [input_size] + [hidden_size] * (num_layers - 2)
    for i, din in enumerate(dims_in):
        klin, kbn = jax.random.split(keys[i])
        w, b = _linear_params(klin, din, hidden_size)
        g, bt, m, v, eps = _bn_params(kbn, hidden_size)
        wf, bf = _fold_bn_into_linear(w, b, g, bt, m, v, eps)
        layers.append((wf, bf, True))
    # output layer: plain Linear.
    w, b = _linear_params(keys[-1], hidden_size, output_size)
    layers.append((w, b, False))
    return layers


# ---------------------------------------------------------------------------
# Pure-JAX reference for a sanity check
# ---------------------------------------------------------------------------
def fcn_baseline_reference(layers, x, *, leaky_relu=0.15):
    for w, b, act in layers:
        x = x @ w + b
        if act:
            x = jnp.where(x >= 0, x, leaky_relu * x)
    return x


if __name__ == "__main__":
    # Small shapes consistent with the module (input_size = output_size = 52).
    BATCH = 16
    INPUT_SIZE = 52
    HIDDEN_SIZE = 128
    OUTPUT_SIZE = 52
    NUM_LAYERS = 4
    LEAKY = 0.15

    root = jax.random.PRNGKey(0)
    kparams, kx = jax.random.split(root)

    layers = init_fcn_baseline(kparams, INPUT_SIZE, NUM_LAYERS,
                               HIDDEN_SIZE, OUTPUT_SIZE)
    x = jax.random.normal(kx, (BATCH, INPUT_SIZE), jnp.float32)

    out = fcn_baseline_forward(layers, x, leaky_relu=LEAKY)
    out = jax.block_until_ready(out)

    ref = fcn_baseline_reference(layers, x, leaky_relu=LEAKY)
    assert out.shape == (BATCH, OUTPUT_SIZE)
    assert jnp.allclose(out, ref, atol=1e-4, rtol=1e-4), "mismatch vs reference"

    print("KERNEL_OK")
</pallas_src>

<mosaic_0001>
module attributes {stable_mosaic.version = 11 : i64} {
  func.func @_fcn_fused_kernel(%arg0: i32, %arg1: memref<16x128xf32, #tpu.memory_space<vmem>>, %arg2: memref<128x128xf32, #tpu.memory_space<vmem>>, %arg3: memref<1x128xf32, #tpu.memory_space<vmem>>, %arg4: memref<128x128xf32, #tpu.memory_space<vmem>>, %arg5: memref<1x128xf32, #tpu.memory_space<vmem>>, %arg6: memref<128x128xf32, #tpu.memory_space<vmem>>, %arg7: memref<1x128xf32, #tpu.memory_space<vmem>>, %arg8: memref<128x128xf32, #tpu.memory_space<vmem>>, %arg9: memref<1x128xf32, #tpu.memory_space<vmem>>, %arg10: memref<16x128xf32, #tpu.memory_space<vmem>>) attributes {dimension_semantics = [#tpu.dimension_semantics<parallel>], iteration_bounds = array<i64: 1>, scalar_prefetch = 0 : i64, scratch_operands = 0 : i64, tpu.core_type = #tpu.core_type<tc>, window_params = [{transform_indices = @transform_0, window_bounds = array<i64: 16, 128>}, {pipeline_mode = #tpu.pipeline_mode<synchronous>, transform_indices = @transform_1, window_bounds = array<i64: 128, 128>}, {pipeline_mode = #tpu.pipeline_mode<synchronous>, transform_indices = @transform_2, window_bounds = array<i64: 1, 128>}, {pipeline_mode = #tpu.pipeline_mode<synchronous>, transform_indices = @transform_3, window_bounds = array<i64: 128, 128>}, {pipeline_mode = #tpu.pipeline_mode<synchronous>, transform_indices = @transform_4, window_bounds = array<i64: 1, 128>}, {pipeline_mode = #tpu.pipeline_mode<synchronous>, transform_indices = @transform_5, window_bounds = array<i64: 128, 128>}, {pipeline_mode = #tpu.pipeline_mode<synchronous>, transform_indices = @transform_6, window_bounds = array<i64: 1, 128>}, {pipeline_mode = #tpu.pipeline_mode<synchronous>, transform_indices = @transform_7, window_bounds = array<i64: 128, 128>}, {pipeline_mode = #tpu.pipeline_mode<synchronous>, transform_indices = @transform_8, window_bounds = array<i64: 1, 128>}, {transform_indices = @transform_9, window_bounds = array<i64: 16, 128>}]} {
    %c0 = arith.constant 0 : index
    %c0_0 = arith.constant 0 : index
    %0 = vector.load %arg1[%c0, %c0_0] : memref<16x128xf32, #tpu.memory_space<vmem>>, vector<16x128xf32>
    %c0_1 = arith.constant 0 : index
    %c0_2 = arith.constant 0 : index
    %1 = vector.load %arg2[%c0_1, %c0_2] : memref<128x128xf32, #tpu.memory_space<vmem>>, vector<128x128xf32>
    %c0_3 = arith.constant 0 : index
    %c0_4 = arith.constant 0 : index
    %2 = vector.load %arg3[%c0_3, %c0_4] : memref<1x128xf32, #tpu.memory_space<vmem>>, vector<1x128xf32>
    %cst = arith.constant dense<0.000000e+00> : vector<16x128xf32>
    %3 = tpu.matmul %0, %1, %cst {dimension_numbers = #tpu.dot_dimension_numbers<[1], [0], [0], [1], [0, 0, 1, 1], [], []>} : vector<16x128xf32>, vector<128x128xf32>, vector<16x128xf32> -> vector<16x128xf32>
    %4 = vector.broadcast %2 : vector<1x128xf32> to vector<16x128xf32>
    %5 = arith.addf %3, %4 : vector<16x128xf32>
    %cst_5 = arith.constant 0.000000e+00 : f32
    %6 = vector.broadcast %cst_5 : f32 to vector<16x128xf32>
    %7 = arith.cmpf oge, %5, %6 : vector<16x128xf32>
    %cst_6 = arith.constant 1.500000e-01 : f32
    %8 = vector.broadcast %cst_6 : f32 to vector<16x128xf32>
    %9 = arith.mulf %8, %5 : vector<16x128xf32>
    %10 = arith.select %7, %5, %9 : vector<16x128xi1>, vector<16x128xf32>
    %c0_7 = arith.constant 0 : index
    %c0_8 = arith.constant 0 : index
    %11 = vector.load %arg4[%c0_7, %c0_8] : memref<128x128xf32, #tpu.memory_space<vmem>>, vector<128x128xf32>
    %c0_9 = arith.constant 0 : index
    %c0_10 = arith.constant 0 : index
    %12 = vector.load %arg5[%c0_9, %c0_10] : memref<1x128xf32, #tpu.memory_space<vmem>>, vector<1x128xf32>
    %cst_11 = arith.constant dense<0.000000e+00> : vector<16x128xf32>
    %13 = tpu.matmul %10, %11, %cst_11 {dimension_numbers = #tpu.dot_dimension_numbers<[1], [0], [0], [1], [0, 0, 1, 1], [], []>} : vector<16x128xf32>, vector<128x128xf32>, vector<16x128xf32> -> vector<16x128xf32>
    %14 = vector.broadcast %12 : vector<1x128xf32> to vector<16x128xf32>
    %15 = arith.addf %13, %14 : vector<16x128xf32>
    %cst_12 = arith.constant 0.000000e+00 : f32
    %16 = vector.broadcast %cst_12 : f32 to vector<16x128xf32>
    %17 = arith.cmpf oge, %15, %16 : vector<16x128xf32>
    %cst_13 = arith.constant 1.500000e-01 : f32
    %18 = vector.broadcast %cst_13 : f32 to vector<16x128xf32>
    %19 = arith.mulf %18, %15 : vector<16x128xf32>
    %20 = arith.select %17, %15, %19 : vector<16x128xi1>, vector<16x128xf32>
    %c0_14 = arith.constant 0 : index
    %c0_15 = arith.constant 0 : index
    %21 = vector.load %arg6[%c0_14, %c0_15] : memref<128x128xf32, #tpu.memory_space<vmem>>, vector<128x128xf32>
    %c0_16 = arith.constant 0 : index
    %c0_17 = arith.constant 0 : index
    %22 = vector.load %arg7[%c0_16, %c0_17] : memref<1x128xf32, #tpu.memory_space<vmem>>, vector<1x128xf32>
    %cst_18 = arith.constant dense<0.000000e+00> : vector<16x128xf32>
    %23 = tpu.matmul %20, %21, %cst_18 {dimension_numbers = #tpu.dot_dimension_numbers<[1], [0], [0], [1], [0, 0, 1, 1], [], []>} : vector<16x128xf32>, vector<128x128xf32>, vector<16x128xf32> -> vector<16x128xf32>
    %24 = vector.broadcast %22 : vector<1x128xf32> to vector<16x128xf32>
    %25 = arith.addf %23, %24 : vector<16x128xf32>
    %cst_19 = arith.constant 0.000000e+00 : f32
    %26 = vector.broadcast %cst_19 : f32 to vector<16x128xf32>
    %27 = arith.cmpf oge, %25, %26 : vector<16x128xf32>
    %cst_20 = arith.constant 1.500000e-01 : f32
    %28 = vector.broadcast %cst_20 : f32 to vector<16x128xf32>
    %29 = arith.mulf %28, %25 : vector<16x128xf32>
    %30 = arith.select %27, %25, %29 : vector<16x128xi1>, vector<16x128xf32>
    %c0_21 = arith.constant 0 : index
    %c0_22 = arith.constant 0 : index
    %31 = vector.load %arg8[%c0_21, %c0_22] : memref<128x128xf32, #tpu.memory_space<vmem>>, vector<128x128xf32>
    %c0_23 = arith.constant 0 : index
    %c0_24 = arith.constant 0 : index
    %32 = vector.load %arg9[%c0_23, %c0_24] : memref<1x128xf32, #tpu.memory_space<vmem>>, vector<1x128xf32>
    %cst_25 = arith.constant dense<0.000000e+00> : vector<16x128xf32>
    %33 = tpu.matmul %30, %31, %cst_25 {dimension_numbers = #tpu.dot_dimension_numbers<[1], [0], [0], [1], [0, 0, 1, 1], [], []>} : vector<16x128xf32>, vector<128x128xf32>, vector<16x128xf32> -> vector<16x128xf32>
    %34 = vector.broadcast %32 : vector<1x128xf32> to vector<16x128xf32>
    %35 = arith.addf %33, %34 : vector<16x128xf32>
    %c0_26 = arith.constant 0 : index
    %c0_27 = arith.constant 0 : index
    %36 = vector.load %arg10[%c0_26, %c0_27] : memref<16x128xf32, #tpu.memory_space<vmem>>, vector<16x128xf32>
    tpu.vector_store %arg10[%c0_26, %c0_27], %35 {strides = array<i32>} : memref<16x128xf32, #tpu.memory_space<vmem>>, vector<16x128xf32>,
    return
  }
  func.func @transform_0(%arg0: i32) -> (i32, i32) {
    %c0_i32 = arith.constant 0 : i32
    %c0_i32_0 = arith.constant 0 : i32
    return %arg0, %c0_i32 : i32, i32
  }
  func.func @transform_1(%arg0: i32) -> (i32, i32) {
    %c0_i32 = arith.constant 0 : i32
    %c0_i32_0 = arith.constant 0 : i32
    %c0_i32_1 = arith.constant 0 : i32
    return %c0_i32, %c0_i32_0 : i32, i32
  }
  func.func @transform_2(%arg0: i32) -> (i32, i32) {
    %c0_i32 = arith.constant 0 : i32
    %c0_i32_0 = arith.constant 0 : i32
    %c0_i32_1 = arith.constant 0 : i32
    return %c0_i32, %c0_i32_0 : i32, i32
  }
  func.func @transform_3(%arg0: i32) -> (i32, i32) {
    %c0_i32 = arith.constant 0 : i32
    %c0_i32_0 = arith.constant 0 : i32
    %c0_i32_1 = arith.constant 0 : i32
    return %c0_i32, %c0_i32_0 : i32, i32
  }
  func.func @transform_4(%arg0: i32) -> (i32, i32) {
    %c0_i32 = arith.constant 0 : i32
    %c0_i32_0 = arith.constant 0 : i32
    %c0_i32_1 = arith.constant 0 : i32
    return %c0_i32, %c0_i32_0 : i32, i32
  }
  func.func @transform_5(%arg0: i32) -> (i32, i32) {
    %c0_i32 = arith.constant 0 : i32
    %c0_i32_0 = arith.constant 0 : i32
    %c0_i32_1 = arith.constant 0 : i32
    return %c0_i32, %c0_i32_0 : i32, i32
  }
  func.func @transform_6(%arg0: i32) -> (i32, i32) {
    %c0_i32 = arith.constant 0 : i32
    %c0_i32_0 = arith.constant 0 : i32
    %c0_i32_1 = arith.constant 0 : i32
    return %c0_i32, %c0_i32_0 : i32, i32
  }
  func.func @transform_7(%arg0: i32) -> (i32, i32) {
    %c0_i32 = arith.constant 0 : i32
    %c0_i32_0 = arith.constant 0 : i32
    %c0_i32_1 = arith.constant 0 : i32
    return %c0_i32, %c0_i32_0 : i32, i32
  }
  func.func @transform_8(%arg0: i32) -> (i32, i32) {
    %c0_i32 = arith.constant 0 : i32
    %c0_i32_0 = arith.constant 0 : i32
    %c0_i32_1 = arith.constant 0 : i32
    return %c0_i32, %c0_i32_0 : i32, i32
  }
  func.func @transform_9(%arg0: i32) -> (i32, i32) {
    %c0_i32 = arith.constant 0 : i32
    %c0_i32_0 = arith.constant 0 : i32
    return %arg0, %c0_i32 : i32, i32
  }
}

</mosaic_0001>

<llo_original>
// kernel: tpu_custom_call.1
$region0: #{tpu_custom_call.1}
  #allocation0 [shape = 'u32[]', space=smem, size = 0x4, offset = 0x4, fixed_abs, tag = 'smem constant byte address 0x4 - core index']
  #allocation1 [shape = 'u32[144,128]{1,0:T(1,128)}', space=vmem, size = 0x12000, scoped, tag = 'internal scratch']
  %s0 = inlined_call_operand.hbm [shape: f32[16,128], index: 0, kind: input, shape index: {}]
  %s1 = inlined_call_operand.hbm [shape: f32[128,128], index: 1, kind: input, shape index: {}]
  %s2 = inlined_call_operand.vmem [shape: f32[1,128], index: 2, kind: input, shape index: {}]
  %s3 = inlined_call_operand.hbm [shape: f32[128,128], index: 3, kind: input, shape index: {}]
  %s4 = inlined_call_operand.vmem [shape: f32[1,128], index: 4, kind: input, shape index: {}]
  %s5 = inlined_call_operand.hbm [shape: f32[128,128], index: 5, kind: input, shape index: {}]
  %s6 = inlined_call_operand.vmem [shape: f32[1,128], index: 6, kind: input, shape index: {}]
  %s7 = inlined_call_operand.hbm [shape: f32[128,128], index: 7, kind: input, shape index: {}]
  %s8 = inlined_call_operand.vmem [shape: f32[1,128], index: 8, kind: input, shape index: {}]
  %s9 = inlined_call_operand.hbm [shape: f32[16,128], index: 9, kind: output, shape index: {}]
  %s10 = sld [smem:[#allocation0]]
  $region66: #{tpu_custom_call.1} parent=0
    _
  %s12 = ssub.s32 1, %s10
  %s13 = scalar_select 0, %s12, %s10
  $region1: #{tpu_custom_call.1} parent=0
    #allocation2 [shape = 'u8[8192]{0}', space=vmem, size = 0x2000, scoped, tag = 'input window, operand 0, single buffered']
    #allocation3 [shape = 's32[1]{0}', space=sflag, size = 0x4, scoped, tag = 'scoped memory for tpu_custom_call.1']
    #allocation4 [shape = 's32[1]{0}', space=sflag, size = 0x4, scoped, tag = 'scoped memory for tpu_custom_call.1']
    #allocation5 [shape = 'u8[65536]{0}', space=vmem, size = 0x10000, scoped, tag = 'input window, operand 1, single buffered']
    #allocation6 [shape = 's32[1]{0}', space=sflag, size = 0x4, scoped, tag = 'scoped memory for tpu_custom_call.1']
    #allocation7 [shape = 'u8[65536]{0}', space=vmem, size = 0x10000, scoped, tag = 'input window, operand 3, single buffered']
    #allocation8 [shape = 'u8[65536]{0}', space=vmem, size = 0x10000, scoped, tag = 'input window, operand 5, single buffered']
    #allocation9 [shape = 's32[1]{0}', space=sflag, size = 0x4, scoped, tag = 'scoped memory for tpu_custom_call.1']
    #allocation10 [shape = 'u8[65536]{0}', space=vmem, size = 0x10000, scoped, tag = 'input window, operand 7, single buffered']
    #allocation11 [shape = 'u8[8192]{0}', space=vmem, size = 0x2000, scoped, tag = 'output window, operand 0, single buffered']
    %14 = vsyncpa [#allocation3], 0
    %15 = vsyncpa [#allocation6], 0
    %16 = vsyncpa [#allocation9], 0
    %17 = vsyncpa [#allocation4], 0
    // Predicated region
    $region2: #{tpu_custom_call.1} parent=1 // pred_check
      _
    $region3: #{tpu_custom_call.1} parent=1 // pred_check_branch
      %19 = sbr.rel (0) target = $region5
    $region4: #{tpu_custom_call.1} parent=1 // pred_region
      %s21 = ssub.s32 256, 256
      %22 = vsyncadd [#allocation3], %s21
      %s23 = sshll.u32 [#allocation2], 4
      %s24 = int_to_ptr.vmem [resolvable:$true] %s23
      %29 = dma.hbm_to_vmem [thread:$0]  %s0, 256, %s24, [#allocation3], 128, 128, 8
    $region5: #{tpu_custom_call.1} parent=1 // pred_fallthru
      _
    // Predicated region
    $region6: #{tpu_custom_call.1} parent=1 // pred_check
      _
    $region7: #{tpu_custom_call.1} parent=1 // pred_check_branch
      %31 = sbr.rel (0) target = $region9
    $region8: #{tpu_custom_call.1} parent=1 // pred_region
      %s33 = ssub.s32 2048, 2048
      %34 = vsyncadd [#allocation6], %s33
      %s35 = sshll.u32 [#allocation5], 4
      %s36 = int_to_ptr.vmem [resolvable:$true] %s35
      %41 = dma.hbm_to_vmem [thread:$0]  %s1, 2048, %s36, [#allocation6], 128, 128, 8
    $region9: #{tpu_custom_call.1} parent=1 // pred_fallthru
      _
    // Predicated region
    $region10: #{tpu_custom_call.1} parent=1 // pred_check
      _
    $region11: #{tpu_custom_call.1} parent=1 // pred_check_branch
      %43 = sbr.rel (0) target = $region13
    $region12: #{tpu_custom_call.1} parent=1 // pred_region
      _
    $region13: #{tpu_custom_call.1} parent=1 // pred_fallthru
      _
    // Predicated region
    $region14: #{tpu_custom_call.1} parent=1 // pred_check
      _
    $region15: #{tpu_custom_call.1} parent=1 // pred_check_branch
      %45 = sbr.rel (0) target = $region17
    $region16: #{tpu_custom_call.1} parent=1 // pred_region
      %s47 = ssub.s32 2048, 2048
      %48 = vsyncadd [#allocation6], %s47
      %s49 = sshll.u32 [#allocation7], 4
      %s50 = int_to_ptr.vmem [resolvable:$true] %s49
      %55 = dma.hbm_to_vmem [thread:$0]  %s3, 2048, %s50, [#allocation6], 128, 128, 8
    $region17: #{tpu_custom_call.1} parent=1 // pred_fallthru
      _
    // Predicated region
    $region18: #{tpu_custom_call.1} parent=1 // pred_check
      _
    $region19: #{tpu_custom_call.1} parent=1 // pred_check_branch
      %57 = sbr.rel (0) target = $region21
    $region20: #{tpu_custom_call.1} parent=1 // pred_region
      _
    $region21: #{tpu_custom_call.1} parent=1 // pred_fallthru
      _
    // Predicated region
    $region22: #{tpu_custom_call.1} parent=1 // pred_check
      _
    $region23: #{tpu_custom_call.1} parent=1 // pred_check_branch
      %59 = sbr.rel (0) target = $region25
    $region24: #{tpu_custom_call.1} parent=1 // pred_region
      %s61 = ssub.s32 2048, 2048
      %62 = vsyncadd [#allocation9], %s61
      %s63 = sshll.u32 [#allocation8], 4
      %s64 = int_to_ptr.vmem [resolvable:$true] %s63
      %69 = dma.hbm_to_vmem [thread:$0]  %s5, 2048, %s64, [#allocation9], 128, 128, 8
    $region25: #{tpu_custom_call.1} parent=1 // pred_fallthru
      _
    // Predicated region
    $region26: #{tpu_custom_call.1} parent=1 // pred_check
      _
    $region27: #{tpu_custom_call.1} parent=1 // pred_check_branch
      %71 = sbr.rel (0) target = $region29
    $region28: #{tpu_custom_call.1} parent=1 // pred_region
      _
    $region29: #{tpu_custom_call.1} parent=1 // pred_fallthru
      _
    // Predicated region
    $region30: #{tpu_custom_call.1} parent=1 // pred_check
      _
    $region31: #{tpu_custom_call.1} parent=1 // pred_check_branch
      %73 = sbr.rel (0) target = $region33
    $region32: #{tpu_custom_call.1} parent=1 // pred_region
      %s75 = ssub.s32 2048, 2048
      %76 = vsyncadd [#allocation9], %s75
      %s77 = sshll.u32 [#allocation10], 4
      %s78 = int_to_ptr.vmem [resolvable:$true] %s77
      %83 = dma.hbm_to_vmem [thread:$0]  %s7, 2048, %s78, [#allocation9], 128, 128, 8
    $region33: #{tpu_custom_call.1} parent=1 // pred_fallthru
      _
    // Predicated region
    $region34: #{tpu_custom_call.1} parent=1 // pred_check
      _
    $region35: #{tpu_custom_call.1} parent=1 // pred_check_branch
      %85 = sbr.rel (0) target = $region37
    $region36: #{tpu_custom_call.1} parent=1 // pred_region
      _
    $region37: #{tpu_custom_call.1} parent=1 // pred_fallthru
      _
    // Predicated region
    $region38: #{tpu_custom_call.1} parent=1 // pred_check
      _
    $region39: #{tpu_custom_call.1} parent=1 // pred_check_branch
      %87 = sbr.rel (0) target = $region41
    $region40: #{tpu_custom_call.1} parent=1 // pred_region
      %88 = dma.done [#allocation3], 256
    $region41: #{tpu_custom_call.1} parent=1 // pred_fallthru
      _
    // Predicated region
    $region42: #{tpu_custom_call.1} parent=1 // pred_check
      _
    $region43: #{tpu_custom_call.1} parent=1 // pred_check_branch
      %90 = sbr.rel (0) target = $region45
    $region44: #{tpu_custom_call.1} parent=1 // pred_region
      %91 = dma.done [#allocation6], 2048
    $region45: #{tpu_custom_call.1} parent=1 // pred_fallthru
      _
    // Predicated region
    $region46: #{tpu_custom_call.1} parent=1 // pred_check
      _
    $region47: #{tpu_custom_call.1} parent=1 // pred_check_branch
      %93 = sbr.rel (0) target = $region49
    $region48: #{tpu_custom_call.1} parent=1 // pred_region
      %94 = dma.done [#allocation6], 2048
    $region49: #{tpu_custom_call.1} parent=1 // pred_fallthru
      _
    // Predicated region
    $region50: #{tpu_custom_call.1} parent=1 // pred_check
      _
    $region51: #{tpu_custom_call.1} parent=1 // pred_check_branch
      %96 = sbr.rel (0) target = $region53
    $region52: #{tpu_custom_call.1} parent=1 // pred_region
      %97 = dma.done [#allocation9], 2048
    $region53: #{tpu_custom_call.1} parent=1 // pred_fallthru
      _
    // Predicated region
    $region54: #{tpu_custom_call.1} parent=1 // pred_check
      _
    $region55: #{tpu_custom_call.1} parent=1 // pred_check_branch
      %99 = sbr.rel (0) target = $region57
    $region56: #{tpu_custom_call.1} parent=1 // pred_region
      %100 = dma.done [#allocation9], 2048
    $region57: #{tpu_custom_call.1} parent=1 // pred_fallthru
      _
    %v101 = vld [vmem:[#allocation2] sm:$0xff]
    %v102 = vld [vmem:[#allocation2 + $0x8] sm:$0xff]
    %v103 = vld [vmem:[#allocation5] sm:$0xff]
    %v104 = vld [vmem:[#allocation5 + $0x8] sm:$0xff]
    %v105 = vld [vmem:[#allocation5 + $0x10] sm:$0xff]
    %v106 = vld [vmem:[#allocation5 + $0x18] sm:$0xff]
    %v107 = vld [vmem:[#allocation5 + $0x20] sm:$0xff]
    %v108 = vld [vmem:[#allocation5 + $0x28] sm:$0xff]
    %v109 = vld [vmem:[#allocation5 + $0x30] sm:$0xff]
    %v110 = vld [vmem:[#allocation5 + $0x38] sm:$0xff]
    %v111 = vld [vmem:[#allocation5 + $0x40] sm:$0xff]
    %v112 = vld [vmem:[#allocation5 + $0x48] sm:$0xff]
    %v113 = vld [vmem:[#allocation5 + $0x50] sm:$0xff]
    %v114 = vld [vmem:[#allocation5 + $0x58] sm:$0xff]
    %v115 = vld [vmem:[#allocation5 + $0x60] sm:$0xff]
    %v116 = vld [vmem:[#allocation5 + $0x68] sm:$0xff]
    %v117 = vld [vmem:[#allocation5 + $0x70] sm:$0xff]
    %v118 = vld [vmem:[#allocation5 + $0x78] sm:$0xff]
    %v119 = vld [vmem:[%s2] sm:$0x1]
    %v121 = vlaneseq
    %v122 = vshrl.u32 %v121, 7
    %v123 = vsub.s32 0, %v122
    %v124 = vrot.slane %v119, %v123
    %126 = vmatprep.subr.mxu0 0.0
    %127 = vmatpush1.msra.mxu0 %v118
    %128 = vmatprep.subr.mxu0 0.0
    %129 = vmatpush1.msra.mxu0 %v117
    %130 = vmatprep.subr.mxu0 0.0
    %131 = vmatpush1.msra.mxu0 %v116
    %132 = vmatprep.subr.mxu0 0.0
    %133 = vmatpush1.msra.mxu0 %v115
    %134 = vmatprep.subr.mxu0 0.0
    %135 = vmatpush1.msra.mxu0 %v114
    %136 = vmatprep.subr.mxu0 0.0
    %137 = vmatpush1.msra.mxu0 %v113
    %138 = vmatprep.subr.mxu0 0.0
    %139 = vmatpush1.msra.mxu0 %v112
    %140 = vmatprep.subr.mxu0 0.0
    %141 = vmatpush1.msra.mxu0 %v111
    %142 = vmatprep.subr.mxu0 0.0
    %143 = vmatpush1.msra.mxu0 %v110
    %144 = vmatprep.subr.mxu0 0.0
    %145 = vmatpush1.msra.mxu0 %v109
    %146 = vmatprep.subr.mxu0 0.0
    %147 = vmatpush1.msra.mxu0 %v108
    %148 = vmatprep.subr.mxu0 0.0
    %149 = vmatpush1.msra.mxu0 %v107
    %150 = vmatprep.subr.mxu0 0.0
    %151 = vmatpush1.msra.mxu0 %v106
    %152 = vmatprep.subr.mxu0 0.0
    %153 = vmatpush1.msra.mxu0 %v105
    %154 = vmatprep.subr.mxu0 0.0
    %155 = vmatpush1.msra.mxu0 %v104
    %156 = vmatprep.subr.mxu0 0.0
    %157 = vmatpush1.msra.mxu0 %v103
    %158 = vmatprep.subr.mxu0 0.0
    %159 = vmatpush2.msra.mxu0 0.0
    %160 = vmatprep.subr.mxu0 0.0
    %161 = vmatpush2.msra.mxu0 0.0
    %162 = vmatprep.subr.mxu0 0.0
    %163 = vmatpush2.msra.mxu0 0.0
    %164 = vmatprep.subr.mxu0 0.0
    %165 = vmatpush2.msra.mxu0 0.0
    %166 = vmatprep.subr.mxu0 0.0
    %167 = vmatpush2.msra.mxu0 0.0
    %168 = vmatprep.subr.mxu0 0.0
    %169 = vmatpush2.msra.mxu0 0.0
    %170 = vmatprep.subr.mxu0 0.0
    %171 = vmatpush2.msra.mxu0 0.0
    %172 = vmatprep.subr.mxu0 0.0
    %173 = vmatpush2.msra.mxu0 0.0
    %174 = vmatprep.subr.mxu0 0.0
    %175 = vmatpush2.msra.mxu0 0.0
    %176 = vmatprep.subr.mxu0 0.0
    %177 = vmatpush2.msra.mxu0 0.0
    %178 = vmatprep.subr.mxu0 0.0
    %179 = vmatpush2.msra.mxu0 0.0
    %180 = vmatprep.subr.mxu0 0.0
    %181 = vmatpush2.msra.mxu0 0.0
    %182 = vmatprep.subr.mxu0 0.0
    %183 = vmatpush2.msra.mxu0 0.0
    %184 = vmatprep.subr.mxu0 0.0
    %185 = vmatpush2.msra.mxu0 0.0
    %186 = vmatprep.subr.mxu0 0.0
    %187 = vmatpush2.msra.mxu0 0.0
    %188 = vmatprep.subr.mxu0 0.0
    %189 = vmatpush2.msra.mxu0 0.0
    %190 = vmatprep.mubr.f32.mxu0 0.0
    %191 = vmatmul.mubr.f32.gmra.mxu0 %v101
    %v192 = vpop.f32.mrf.mxu0
    %v193 = vadd.f32 %v124, %v192
    %v194 = vpop.f32.mrf.mxu0
    %195 = vmatprep.mubr.f32.mxu0 0.0
    %196 = vmatmul.mubr.f32.gmra.mxu0 %v102
    %v197 = vpop.f32.mrf.mxu0
    %v198 = vadd.f32 %v124, %v197
    %v199 = vpop.f32.mrf.mxu0
    %200 = vdwg.mxu0
    %vm201 = vcmp.ge.f32.partialorder %v193, 0.0
    %vm202 = vcmp.ge.f32.partialorder %v198, 0.0
    %v203 = vmul.f32 %v193, 0.15
    %v204 = vmul.f32 %v198, 0.15
    %v205 = vsel %vm201, %v193, %v203
    %v206 = vsel %vm202, %v198, %v204
    %v207 = vld [vmem:[#allocation7] sm:$0xff]
    %v208 = vld [vmem:[#allocation7 + $0x8] sm:$0xff]
    %v209 = vld [vmem:[#allocation7 + $0x10] sm:$0xff]
    %v210 = vld [vmem:[#allocation7 + $0x18] sm:$0xff]
    %v211 = vld [vmem:[#allocation7 + $0x20] sm:$0xff]
    %v212 = vld [vmem:[#allocation7 + $0x28] sm:$0xff]
    %v213 = vld [vmem:[#allocation7 + $0x30] sm:$0xff]
    %v214 = vld [vmem:[#allocation7 + $0x38] sm:$0xff]
    %v215 = vld [vmem:[#allocation7 + $0x40] sm:$0xff]
    %v216 = vld [vmem:[#allocation7 + $0x48] sm:$0xff]
    %v217 = vld [vmem:[#allocation7 + $0x50] sm:$0xff]
    %v218 = vld [vmem:[#allocation7 + $0x58] sm:$0xff]
    %v219 = vld [vmem:[#allocation7 + $0x60] sm:$0xff]
    %v220 = vld [vmem:[#allocation7 + $0x68] sm:$0xff]
    %v221 = vld [vmem:[#allocation7 + $0x70] sm:$0xff]
    %v222 = vld [vmem:[#allocation7 + $0x78] sm:$0xff]
    %v223 = vld [vmem:[%s4] sm:$0x1]
    %v225 = vlaneseq
    %v226 = vshrl.u32 %v225, 7
    %v227 = vsub.s32 0, %v226
    %v228 = vrot.slane %v223, %v227
    %230 = vmatprep.subr.mxu0 0.0
    %231 = vmatpush1.msra.mxu0 %v222
    %232 = vmatprep.subr.mxu0 0.0
    %233 = vmatpush1.msra.mxu0 %v221
    %234 = vmatprep.subr.mxu0 0.0
    %235 = vmatpush1.msra.mxu0 %v220
    %236 = vmatprep.subr.mxu0 0.0
    %237 = vmatpush1.msra.mxu0 %v219
    %238 = vmatprep.subr.mxu0 0.0
    %239 = vmatpush1.msra.mxu0 %v218
    %240 = vmatprep.subr.mxu0 0.0
    %241 = vmatpush1.msra.mxu0 %v217
    %242 = vmatprep.subr.mxu0 0.0
    %243 = vmatpush1.msra.mxu0 %v216
    %244 = vmatprep.subr.mxu0 0.0
    %245 = vmatpush1.msra.mxu0 %v215
    %246 = vmatprep.subr.mxu0 0.0
    %247 = vmatpush1.msra.mxu0 %v214
    %248 = vmatprep.subr.mxu0 0.0
    %249 = vmatpush1.msra.mxu0 %v213
    %250 = vmatprep.subr.mxu0 0.0
    %251 = vmatpush1.msra.mxu0 %v212
    %252 = vmatprep.subr.mxu0 0.0
    %253 = vmatpush1.msra.mxu0 %v211
    %254 = vmatprep.subr.mxu0 0.0
    %255 = vmatpush1.msra.mxu0 %v210
    %256 = vmatprep.subr.mxu0 0.0
    %257 = vmatpush1.msra.mxu0 %v209
    %258 = vmatprep.subr.mxu0 0.0
    %259 = vmatpush1.msra.mxu0 %v208
    %260 = vmatprep.subr.mxu0 0.0
    %261 = vmatpush1.msra.mxu0 %v207
    %262 = vmatprep.subr.mxu0 0.0
    %263 = vmatpush2.msra.mxu0 0.0
    %264 = vmatprep.subr.mxu0 0.0
    %265 = vmatpush2.msra.mxu0 0.0
    %266 = vmatprep.subr.mxu0 0.0
    %267 = vmatpush2.msra.mxu0 0.0
    %268 = vmatprep.subr.mxu0 0.0
    %269 = vmatpush2.msra.mxu0 0.0
    %270 = vmatprep.subr.mxu0 0.0
    %271 = vmatpush2.msra.mxu0 0.0
    %272 = vmatprep.subr.mxu0 0.0
    %273 = vmatpush2.msra.mxu0 0.0
    %274 = vmatprep.subr.mxu0 0.0
    %275 = vmatpush2.msra.mxu0 0.0
    %276 = vmatprep.subr.mxu0 0.0
    %277 = vmatpush2.msra.mxu0 0.0
    %278 = vmatprep.subr.mxu0 0.0
    %279 = vmatpush2.msra.mxu0 0.0
    %280 = vmatprep.subr.mxu0 0.0
    %281 = vmatpush2.msra.mxu0 0.0
    %282 = vmatprep.subr.mxu0 0.0
    %283 = vmatpush2.msra.mxu0 0.0
    %284 = vmatprep.subr.mxu0 0.0
    %285 = vmatpush2.msra.mxu0 0.0
    %286 = vmatprep.subr.mxu0 0.0
    %287 = vmatpush2.msra.mxu0 0.0
    %288 = vmatprep.subr.mxu0 0.0
    %289 = vmatpush2.msra.mxu0 0.0
    %290 = vmatprep.subr.mxu0 0.0
    %291 = vmatpush2.msra.mxu0 0.0
    %292 = vmatprep.subr.mxu0 0.0
    %293 = vmatpush2.msra.mxu0 0.0
    %294 = vmatprep.mubr.f32.mxu0 0.0
    %295 = vmatmul.mubr.f32.gmra.mxu0 %v205
    %v296 = vpop.f32.mrf.mxu0
    %v297 = vadd.f32 %v228, %v296
    %v298 = vpop.f32.mrf.mxu0
    %299 = vmatprep.mubr.f32.mxu0 0.0
    %300 = vmatmul.mubr.f32.gmra.mxu0 %v206
    %v301 = vpop.f32.mrf.mxu0
    %v302 = vadd.f32 %v228, %v301
    %v303 = vpop.f32.mrf.mxu0
    %304 = vdwg.mxu0
    %vm305 = vcmp.ge.f32.partialorder %v297, 0.0
    %vm306 = vcmp.ge.f32.partialorder %v302, 0.0
    %v307 = vmul.f32 %v297, 0.15
    %v308 = vmul.f32 %v302, 0.15
    %v309 = vsel %vm305, %v297, %v307
    %v310 = vsel %vm306, %v302, %v308
    %v311 = vld [vmem:[#allocation8] sm:$0xff]
    %v312 = vld [vmem:[#allocation8 + $0x8] sm:$0xff]
    %v313 = vld [vmem:[#allocation8 + $0x10] sm:$0xff]
    %v314 = vld [vmem:[#allocation8 + $0x18] sm:$0xff]
    %v315 = vld [vmem:[#allocation8 + $0x20] sm:$0xff]
    %v316 = vld [vmem:[#allocation8 + $0x28] sm:$0xff]
    %v317 = vld [vmem:[#allocation8 + $0x30] sm:$0xff]
    %v318 = vld [vmem:[#allocation8 + $0x38] sm:$0xff]
    %v319 = vld [vmem:[#allocation8 + $0x40] sm:$0xff]
    %v320 = vld [vmem:[#allocation8 + $0x48] sm:$0xff]
    %v321 = vld [vmem:[#allocation8 + $0x50] sm:$0xff]
    %v322 = vld [vmem:[#allocation8 + $0x58] sm:$0xff]
    %v323 = vld [vmem:[#allocation8 + $0x60] sm:$0xff]
    %v324 = vld [vmem:[#allocation8 + $0x68] sm:$0xff]
    %v325 = vld [vmem:[#allocation8 + $0x70] sm:$0xff]
    %v326 = vld [vmem:[#allocation8 + $0x78] sm:$0xff]
    %v327 = vld [vmem:[%s6] sm:$0x1]
    %v329 = vlaneseq
    %v330 = vshrl.u32 %v329, 7
    %v331 = vsub.s32 0, %v330
    %v332 = vrot.slane %v327, %v331
    %334 = vmatprep.subr.mxu0 0.0
    %335 = vmatpush1.msra.mxu0 %v326
    %336 = vmatprep.subr.mxu0 0.0
    %337 = vmatpush1.msra.mxu0 %v325
    %338 = vmatprep.subr.mxu0 0.0
    %339 = vmatpush1.msra.mxu0 %v324
    %340 = vmatprep.subr.mxu0 0.0
    %341 = vmatpush1.msra.mxu0 %v323
    %342 = vmatprep.subr.mxu0 0.0
    %343 = vmatpush1.msra.mxu0 %v322
    %344 = vmatprep.subr.mxu0 0.0
    %345 = vmatpush1.msra.mxu0 %v321
    %346 = vmatprep.subr.mxu0 0.0
    %347 = vmatpush1.msra.mxu0 %v320
    %348 = vmatprep.subr.mxu0 0.0
    %349 = vmatpush1.msra.mxu0 %v319
    %350 = vmatprep.subr.mxu0 0.0
    %351 = vmatpush1.msra.mxu0 %v318
    %352 = vmatprep.subr.mxu0 0.0
    %353 = vmatpush1.msra.mxu0 %v317
    %354 = vmatprep.subr.mxu0 0.0
    %355 = vmatpush1.msra.mxu0 %v316
    %356 = vmatprep.subr.mxu0 0.0
    %357 = vmatpush1.msra.mxu0 %v315
    %358 = vmatprep.subr.mxu0 0.0
    %359 = vmatpush1.msra.mxu0 %v314
    %360 = vmatprep.subr.mxu0 0.0
    %361 = vmatpush1.msra.mxu0 %v313
    %362 = vmatprep.subr.mxu0 0.0
    %363 = vmatpush1.msra.mxu0 %v312
    %364 = vmatprep.subr.mxu0 0.0
    %365 = vmatpush1.msra.mxu0 %v311
    %366 = vmatprep.subr.mxu0 0.0
    %367 = vmatpush2.msra.mxu0 0.0
    %368 = vmatprep.subr.mxu0 0.0
    %369 = vmatpush2.msra.mxu0 0.0
    %370 = vmatprep.subr.mxu0 0.0
    %371 = vmatpush2.msra.mxu0 0.0
    %372 = vmatprep.subr.mxu0 0.0
    %373 = vmatpush2.msra.mxu0 0.0
    %374 = vmatprep.subr.mxu0 0.0
    %375 = vmatpush2.msra.mxu0 0.0
    %376 = vmatprep.subr.mxu0 0.0
    %377 = vmatpush2.msra.mxu0 0.0
    %378 = vmatprep.subr.mxu0 0.0
    %379 = vmatpush2.msra.mxu0 0.0
    %380 = vmatprep.subr.mxu0 0.0
    %381 = vmatpush2.msra.mxu0 0.0
    %382 = vmatprep.subr.mxu0 0.0
    %383 = vmatpush2.msra.mxu0 0.0
    %384 = vmatprep.subr.mxu0 0.0
    %385 = vmatpush2.msra.mxu0 0.0
    %386 = vmatprep.subr.mxu0 0.0
    %387 = vmatpush2.msra.mxu0 0.0
    %388 = vmatprep.subr.mxu0 0.0
    %389 = vmatpush2.msra.mxu0 0.0
    %390 = vmatprep.subr.mxu0 0.0
    %391 = vmatpush2.msra.mxu0 0.0
    %392 = vmatprep.subr.mxu0 0.0
    %393 = vmatpush2.msra.mxu0 0.0
    %394 = vmatprep.subr.mxu0 0.0
    %395 = vmatpush2.msra.mxu0 0.0
    %396 = vmatprep.subr.mxu0 0.0
    %397 = vmatpush2.msra.mxu0 0.0
    %398 = vmatprep.mubr.f32.mxu0 0.0
    %399 = vmatmul.mubr.f32.gmra.mxu0 %v309
    %v400 = vpop.f32.mrf.mxu0
    %v401 = vadd.f32 %v332, %v400
    %v402 = vpop.f32.mrf.mxu0
    %403 = vmatprep.mubr.f32.mxu0 0.0
    %404 = vmatmul.mubr.f32.gmra.mxu0 %v310
    %v405 = vpop.f32.mrf.mxu0
    %v406 = vadd.f32 %v332, %v405
    %v407 = vpop.f32.mrf.mxu0
    %408 = vdwg.mxu0
    %vm409 = vcmp.ge.f32.partialorder %v401, 0.0
    %vm410 = vcmp.ge.f32.partialorder %v406, 0.0
    %v411 = vmul.f32 %v401, 0.15
    %v412 = vmul.f32 %v406, 0.15
    %v413 = vsel %vm409, %v401, %v411
    %v414 = vsel %vm410, %v406, %v412
    %v415 = vld [vmem:[#allocation10] sm:$0xff]
    %v416 = vld [vmem:[#allocation10 + $0x8] sm:$0xff]
    %v417 = vld [vmem:[#allocation10 + $0x10] sm:$0xff]
    %v418 = vld [vmem:[#allocation10 + $0x18] sm:$0xff]
    %v419 = vld [vmem:[#allocation10 + $0x20] sm:$0xff]
    %v420 = vld [vmem:[#allocation10 + $0x28] sm:$0xff]
    %v421 = vld [vmem:[#allocation10 + $0x30] sm:$0xff]
    %v422 = vld [vmem:[#allocation10 + $0x38] sm:$0xff]
    %v423 = vld [vmem:[#allocation10 + $0x40] sm:$0xff]
    %v424 = vld [vmem:[#allocation10 + $0x48] sm:$0xff]
    %v425 = vld [vmem:[#allocation10 + $0x50] sm:$0xff]
    %v426 = vld [vmem:[#allocation10 + $0x58] sm:$0xff]
    %v427 = vld [vmem:[#allocation10 + $0x60] sm:$0xff]
    %v428 = vld [vmem:[#allocation10 + $0x68] sm:$0xff]
    %v429 = vld [vmem:[#allocation10 + $0x70] sm:$0xff]
    %v430 = vld [vmem:[#allocation10 + $0x78] sm:$0xff]
    %v431 = vld [vmem:[%s8] sm:$0x1]
    %v433 = vlaneseq
    %v434 = vshrl.u32 %v433, 7
    %v435 = vsub.s32 0, %v434
    %v436 = vrot.slane %v431, %v435
    %438 = vmatprep.subr.mxu0 0.0
    %439 = vmatpush1.msra.mxu0 %v430
    %440 = vmatprep.subr.mxu0 0.0
    %441 = vmatpush1.msra.mxu0 %v429
    %442 = vmatprep.subr.mxu0 0.0
    %443 = vmatpush1.msra.mxu0 %v428
    %444 = vmatprep.subr.mxu0 0.0
    %445 = vmatpush1.msra.mxu0 %v427
    %446 = vmatprep.subr.mxu0 0.0
    %447 = vmatpush1.msra.mxu0 %v426
    %448 = vmatprep.subr.mxu0 0.0
    %449 = vmatpush1.msra.mxu0 %v425
    %450 = vmatprep.subr.mxu0 0.0
    %451 = vmatpush1.msra.mxu0 %v424
    %452 = vmatprep.subr.mxu0 0.0
    %453 = vmatpush1.msra.mxu0 %v423
    %454 = vmatprep.subr.mxu0 0.0
    %455 = vmatpush1.msra.mxu0 %v422
    %456 = vmatprep.subr.mxu0 0.0
    %457 = vmatpush1.msra.mxu0 %v421
    %458 = vmatprep.subr.mxu0 0.0
    %459 = vmatpush1.msra.mxu0 %v420
    %460 = vmatprep.subr.mxu0 0.0
    %461 = vmatpush1.msra.mxu0 %v419
    %462 = vmatprep.subr.mxu0 0.0
    %463 = vmatpush1.msra.mxu0 %v418
    %464 = vmatprep.subr.mxu0 0.0
    %465 = vmatpush1.msra.mxu0 %v417
    %466 = vmatprep.subr.mxu0 0.0
    %467 = vmatpush1.msra.mxu0 %v416
    %468 = vmatprep.subr.mxu0 0.0
    %469 = vmatpush1.msra.mxu0 %v415
    %470 = vmatprep.subr.mxu0 0.0
    %471 = vmatpush2.msra.mxu0 0.0
    %472 = vmatprep.subr.mxu0 0.0
    %473 = vmatpush2.msra.mxu0 0.0
    %474 = vmatprep.subr.mxu0 0.0
    %475 = vmatpush2.msra.mxu0 0.0
    %476 = vmatprep.subr.mxu0 0.0
    %477 = vmatpush2.msra.mxu0 0.0
    %478 = vmatprep.subr.mxu0 0.0
    %479 = vmatpush2.msra.mxu0 0.0
    %480 = vmatprep.subr.mxu0 0.0
    %481 = vmatpush2.msra.mxu0 0.0
    %482 = vmatprep.subr.mxu0 0.0
    %483 = vmatpush2.msra.mxu0 0.0
    %484 = vmatprep.subr.mxu0 0.0
    %485 = vmatpush2.msra.mxu0 0.0
    %486 = vmatprep.subr.mxu0 0.0
    %487 = vmatpush2.msra.mxu0 0.0
    %488 = vmatprep.subr.mxu0 0.0
    %489 = vmatpush2.msra.mxu0 0.0
    %490 = vmatprep.subr.mxu0 0.0
    %491 = vmatpush2.msra.mxu0 0.0
    %492 = vmatprep.subr.mxu0 0.0
    %493 = vmatpush2.msra.mxu0 0.0
    %494 = vmatprep.subr.mxu0 0.0
    %495 = vmatpush2.msra.mxu0 0.0
    %496 = vmatprep.subr.mxu0 0.0
    %497 = vmatpush2.msra.mxu0 0.0
    %498 = vmatprep.subr.mxu0 0.0
    %499 = vmatpush2.msra.mxu0 0.0
    %500 = vmatprep.subr.mxu0 0.0
    %501 = vmatpush2.msra.mxu0 0.0
    %502 = vmatprep.mubr.f32.mxu0 0.0
    %503 = vmatmul.mubr.f32.gmra.mxu0 %v413
    %v504 = vpop.f32.mrf.mxu0
    %v505 = vadd.f32 %v436, %v504
    %v506 = vpop.f32.mrf.mxu0
    %507 = vmatprep.mubr.f32.mxu0 0.0
    %508 = vmatmul.mubr.f32.gmra.mxu0 %v414
    %v509 = vpop.f32.mrf.mxu0
    %v510 = vadd.f32 %v436, %v509
    %v511 = vpop.f32.mrf.mxu0
    %512 = vdwg.mxu0
    %513 = vst [vmem:[#allocation11] sm:$0xff] %v505
    %514 = vst [vmem:[#allocation11 + $0x8] sm:$0xff] %v510
    // Predicated region
    $region58: #{tpu_custom_call.1} parent=1 // pred_check
      _
    $region59: #{tpu_custom_call.1} parent=1 // pred_check_branch
      %516 = sbr.rel (0) target = $region61
    $region60: #{tpu_custom_call.1} parent=1 // pred_region
      %s518 = ssub.s32 256, 256
      %519 = vsyncadd [#allocation4], %s518
      %s520 = sshll.u32 [#allocation11], 4
      %s521 = int_to_ptr.vmem [resolvable:$true] %s520
      %526 = dma.vmem_to_hbm [thread:$0]  %s521, 256, %s9, [#allocation4], 128, 128, 8
    $region61: #{tpu_custom_call.1} parent=1 // pred_fallthru
      _
    // Predicated region
    $region62: #{tpu_custom_call.1} parent=1 // pred_check
      _
    $region63: #{tpu_custom_call.1} parent=1 // pred_check_branch
      %528 = sbr.rel (0) target = $region65
    $region64: #{tpu_custom_call.1} parent=1 // pred_region
      %529 = dma.done [#allocation4], 256
    $region65: #{tpu_custom_call.1} parent=1 // pred_fallthru
      _
    %530 = vsyncpa [#allocation3], 1
    %531 = vsyncpa [#allocation6], 1
    %532 = vsyncpa [#allocation9], 1
    %533 = vsyncpa [#allocation4], 1

</llo_original>
